<compile_context>
chip_gen: v6e
topology: v6e:2x2x1
jax: 0.10.0
libtpu: 0.0.40
codegen_flags: <defaults>
</compile_context>

<pallas_src>
import functools
import math

import jax
import jax.numpy as jnp
from jax.experimental import pallas as pl
from jax.experimental.pallas import tpu as pltpu

_LANE = 128
_IN_FUSED_MAX_BYTES = 4 << 20   # per-image block size above which IN is chunked


def _round_up(v, m):
    return ((v + m - 1) // m) * m


@functools.lru_cache(maxsize=None)
def _vmem_limit_bytes():
    """Generation-aware scoped-VMEM limit (~96 MiB on v5e/v6e, ~48 MiB on v7x)."""
    try:
        cap = int(pltpu.get_tpu_info().vmem_capacity_bytes)
    except Exception:
        cap = 64 * 1024 * 1024
    return max(32 * 1024 * 1024, min(cap * 3 // 4, 100 * 1024 * 1024))


def _mosaic_params(dimension_semantics):
    return pltpu.CompilerParams(
        dimension_semantics=dimension_semantics,
        vmem_limit_bytes=_vmem_limit_bytes())


def _largest_divisor_leq(n, cap):
    cap = max(1, min(n, cap))
    for d in range(cap, 0, -1):
        if n % d == 0:
            return d
    return 1


def _fit_tile(dim, candidates):
    """Largest candidate tile that keeps padding waste <= 25% of the dim."""
    dp = _round_up(dim, _LANE)
    for c in candidates:
        if c <= dp and (_round_up(dp, c) - dp) * 4 <= dp:
            return c
    return _LANE


# ----------------------------------------------------------------------------
# Pallas kernel: tiled matmul (+bias, +activation) for the im2col conv path
# ----------------------------------------------------------------------------
def _matmul_bias_kernel(x_ref, w_ref, b_ref, o_ref, acc_ref, *, activation):
    @pl.when(pl.program_id(2) == 0)
    def _():
        acc_ref[...] = jnp.zeros_like(acc_ref)

    acc_ref[...] += jnp.dot(x_ref[...], w_ref[...],
                            preferred_element_type=jnp.float32)

    @pl.when(pl.program_id(2) == pl.num_programs(2) - 1)
    def _():
        acc = acc_ref[...] + b_ref[...]
        if activation == "relu":
            acc = jnp.maximum(acc, 0.0)
        elif activation == "tanh":
            acc = jnp.tanh(acc)
        o_ref[...] = acc.astype(o_ref.dtype)


def matmul_bias(x, w, b, *, activation="none", out_dtype=jnp.bfloat16):
    """act(x @ w + b): bf16 operands, f32 VMEM accumulation across the K grid.

    Returns (M, Np) with N zero-padded to a multiple of 128 (lane-dense
    stores).  The padded channel tail is kept by callers (deferred slicing).
    """
    M, K = x.shape
    Kw, N = w.shape
    assert K == Kw
    tm = _fit_tile(M, (1024, 512, 256, 128))
    tn = _fit_tile(N, (512, 256, 128))
    tk = _fit_tile(K, (1024, 512, 256, 128))
    Mp, Np, Kp = _round_up(M, tm), _round_up(N, tn), _round_up(K, tk)
    # v7x has 2 TensorCores: keep >=2 blocks on a parallel axis when possible.
    if Mp // tm == 1 and Np // tn == 1 and tm >= 256:
        tm //= 2
        Mp = _round_up(M, tm)

    xp = jnp.pad(x.astype(jnp.bfloat16), ((0, Mp - M), (0, Kp - K)))
    wp = jnp.pad(w.astype(jnp.bfloat16), ((0, Kp - K), (0, Np - N)))
    bp = jnp.pad(b.astype(jnp.float32), (0, Np - N)).reshape(1, Np)

    out = pl.pallas_call(
        functools.partial(_matmul_bias_kernel, activation=activation),
        out_shape=jax.ShapeDtypeStruct((Mp, Np), out_dtype),
        grid_spec=pltpu.PrefetchScalarGridSpec(
            num_scalar_prefetch=0,
            grid=(Mp // tm, Np // tn, Kp // tk),
            in_specs=[
                pl.BlockSpec((tm, tk), lambda i, j, k: (i, k)),
                pl.BlockSpec((tk, tn), lambda i, j, k: (k, j)),
                pl.BlockSpec((1, tn), lambda i, j, k: (0, j)),
            ],
            out_specs=pl.BlockSpec((tm, tn), lambda i, j, k: (i, j)),
            scratch_shapes=[pltpu.VMEM((tm, tn), jnp.float32)],
        ),
        compiler_params=_mosaic_params(("parallel", "parallel", "arbitrary")),
    )(xp, wp, bp)
    return out[:M] if Mp != M else out


# ----------------------------------------------------------------------------
# Pallas kernel: streaming stride-1 conv (no im2col patch matrix)
# ----------------------------------------------------------------------------
def _direct_conv_kernel(x_hbm, w_ref, b_ref, o_ref, xbuf, arow_ref, sem, *,
                        kH, kW, tHo, activation):
    n = pl.program_id(0)
    hb = pl.program_id(1)
    halo = tHo + kH - 1
    # Fetch one halo'd row-tile of the padded NHWC input straight from HBM.
    # TODO(synk): double-buffer this fetch (prefetch next row-tile) to hide DMA.
    cp = pltpu.make_async_copy(x_hbm.at[n, pl.ds(hb * tHo, halo)], xbuf, sem)
    cp.start()
    cp.wait()

    Wo = o_ref.shape[2]

    def row_body(hh, carry):
        arow_ref[...] = jnp.zeros_like(arow_ref)
        for i in range(kH):
            for j in range(kW):
                lhs = xbuf[i + hh, pl.ds(j, Wo), :]            # (Wo, Cin_p)
                arow_ref[...] += jnp.dot(lhs, w_ref[i, j],
                                         preferred_element_type=jnp.float32)
        y = arow_ref[...] + b_ref[...]
        if activation == "relu":
            y = jnp.maximum(y, 0.0)
        elif activation == "tanh":
            y = jnp.tanh(y)
        o_ref[0, hh] = y.astype(o_ref.dtype)
        return carry

    jax.lax.fori_loop(0, tHo, row_body, 0)


def conv2d_direct(x, w, b, *, pad, activation="none", out_dtype=jnp.bfloat16):
    """Stride-1 NHWC conv streaming halo row-tiles from HBM (no im2col).

    x: (N, H, W, Cx) where Cx may carry zero channel-padding (Cx >= Cin).
    w: torch layout (Cout, Cin, kH, kW).  Returns (N, Ho, Wo, Coutp) bf16 with
    Cout zero-padded to a multiple of 128 (deferred channel slicing).
    """
    Nb, H, W, Cx = x.shape
    Cout, Cin, kH, kW = w.shape
    assert Cx >= Cin
    Coutp = _round_up(Cout, _LANE)

    wk = jnp.transpose(w, (2, 3, 1, 0))                       # (kH,kW,Cin,Cout)
    wk = jnp.pad(wk, ((0, 0), (0, 0), (0, Cx - Cin),
                      (0, Coutp - Cout))).astype(jnp.bfloat16)
    bk = jnp.pad(b.astype(jnp.float32), (0, Coutp - Cout)).reshape(1, Coutp)

    if pad:
        x = jnp.pad(x, ((0, 0), (pad, pad), (pad, pad), (0, 0)))
    x = x.astype(jnp.bfloat16)
    Hp, Wp = H + 2 * pad, W + 2 * pad
    Ho, Wo = Hp - kH + 1, Wp - kW + 1

    # Row-tile size: largest divisor of Ho whose working set fits the budget.
    budget = min(_vmem_limit_bytes() // 3, 16 * 1024 * 1024)
    w_bytes = 2 * wk.size * 2
    row_in = Wp * Cx * 2
    row_out = Wo * Coutp * 2 * 2                   # double-buffered bf16 output
    fixed = w_bytes + Wo * Coutp * 4 + (kH - 1) * row_in
    cap = max(1, (budget - fixed) // max(1, row_in + row_out))
    tHo = _largest_divisor_leq(Ho, cap)
    halo = tHo + kH - 1

    kernel = functools.partial(_direct_conv_kernel, kH=kH, kW=kW, tHo=tHo,
                               activation=activation)
    return pl.pallas_call(
        kernel,
        out_shape=jax.ShapeDtypeStruct((Nb, Ho, Wo, Coutp), out_dtype),
        grid_spec=pltpu.PrefetchScalarGridSpec(
            num_scalar_prefetch=0,
            grid=(Nb, Ho // tHo),
            in_specs=[
                pl.BlockSpec(memory_space=pl.ANY),
                pl.BlockSpec((kH, kW, Cx, Coutp), lambda n, h: (0, 0, 0, 0)),
                pl.BlockSpec((1, Coutp), lambda n, h: (0, 0)),
            ],
            out_specs=pl.BlockSpec((1, tHo, Wo, Coutp),
                                   lambda n, h: (n, h, 0, 0)),
            scratch_shapes=[
                pltpu.VMEM((halo, Wp, Cx), jnp.bfloat16),
                pltpu.VMEM((Wo, Coutp), jnp.float32),
                pltpu.SemaphoreType.DMA,
            ],
        ),
        compiler_params=_mosaic_params(("parallel", "parallel")),
    )(x, wk, bk)


# ----------------------------------------------------------------------------
# Pallas kernels: InstanceNorm (+ optional residual, + ReLU)
# ----------------------------------------------------------------------------
def _inorm_fused_kernel(x_ref, o_ref, *, relu, eps):
    x = x_ref[...].astype(jnp.float32)
    mean = jnp.mean(x, axis=1, keepdims=True)
    xc = x - mean
    var = jnp.mean(xc * xc, axis=1, keepdims=True)
    y = xc * jax.lax.rsqrt(var + eps)
    if relu:
        y = jnp.maximum(y, 0.0)
    o_ref[...] = y.astype(o_ref.dtype)


def _inorm_fused_res_kernel(x_ref, r_ref, o_ref, *, relu, eps):
    x = x_ref[...].astype(jnp.float32) + r_ref[...].astype(jnp.float32)
    mean = jnp.mean(x, axis=1, keepdims=True)
    xc = x - mean
    var = jnp.mean(xc * xc, axis=1, keepdims=True)
    y = xc * jax.lax.rsqrt(var + eps)
    if relu:
        y = jnp.maximum(y, 0.0)
    o_ref[...] = y.astype(o_ref.dtype)


def _in_stats_kernel(x_ref, sum_ref, sq_ref):
    @pl.when(pl.program_id(1) == 0)
    def _():
        sum_ref[...] = jnp.zeros_like(sum_ref)
        sq_ref[...] = jnp.zeros_like(sq_ref)

    x = x_ref[...].astype(jnp.float32)
    sum_ref[...] += jnp.sum(x, axis=1, keepdims=True)
    sq_ref[...] += jnp.sum(x * x, axis=1, keepdims=True)


def _in_apply_kernel(x_ref, sum_ref, sq_ref, o_ref, *, relu, eps, count):
    x = x_ref[...].astype(jnp.float32)
    inv = 1.0 / count
    mean = sum_ref[...] * inv
    var = jnp.maximum(sq_ref[...] * inv - mean * mean, 0.0)
    y = (x - mean) * jax.lax.rsqrt(var + eps)
    if relu:
        y = jnp.maximum(y, 0.0)
    o_ref[...] = y.astype(o_ref.dtype)


def _instance_norm_fused(x3, r3, relu, eps, out_dtype):
    Nb, S, C = x3.shape
    spec = pl.BlockSpec((1, S, C), lambda n: (n, 0, 0))
    if r3 is None:
        kernel = functools.partial(_inorm_fused_kernel, relu=relu, eps=eps)
        in_specs, args = [spec], (x3,)
    else:
        kernel = functools.partial(_inorm_fused_res_kernel, relu=relu, eps=eps)
        in_specs, args = [spec, spec], (x3, r3)
    return pl.pallas_call(
        kernel,
        out_shape=jax.ShapeDtypeStruct((Nb, S, C), out_dtype),
        grid_spec=pltpu.PrefetchScalarGridSpec(
            num_scalar_prefetch=0, grid=(Nb,),
            in_specs=in_specs,
            out_specs=pl.BlockSpec((1, S, C), lambda n: (n, 0, 0)),
        ),
        compiler_params=_mosaic_params(("parallel",)),
    )(*args)


def _instance_norm_chunked(x3, relu, eps, out_dtype, max_chunk_elems=None):
    """Two-pass (sum/sumsq, then normalize) IN over spatial chunks, for images
    whose full (H*W, C) slab would not fit VMEM (v7x at production sizes)."""
    Nb, S, C = x3.shape
    cap = max(1, (2 * 1024 * 1024) // (C * 2))
    if max_chunk_elems is not None:
        cap = min(cap, max_chunk_elems)
    tS = _largest_divisor_leq(S, cap)
    nchunk = S // tS

    x_spec = pl.BlockSpec((1, tS, C), lambda n, c: (n, c, 0))
    stat_spec = pl.BlockSpec((1, 1, C), lambda n, c: (n, 0, 0))

    sums, sqs = pl.pallas_call(
        _in_stats_kernel,
        out_shape=(jax.ShapeDtypeStruct((Nb, 1, C), jnp.float32),
                   jax.ShapeDtypeStruct((Nb, 1, C), jnp.float32)),
        grid_spec=pltpu.PrefetchScalarGridSpec(
            num_scalar_prefetch=0, grid=(Nb, nchunk),
            in_specs=[x_spec],
            out_specs=[stat_spec, stat_spec],
        ),
        compiler_params=_mosaic_params(("parallel", "arbitrary")),
    )(x3)

    return pl.pallas_call(
        functools.partial(_in_apply_kernel, relu=relu, eps=eps, count=float(S)),
        out_shape=jax.ShapeDtypeStruct((Nb, S, C), out_dtype),
        grid_spec=pltpu.PrefetchScalarGridSpec(
            num_scalar_prefetch=0, grid=(Nb, nchunk),
            in_specs=[x_spec, stat_spec, stat_spec],
            out_specs=x_spec,
        ),
        compiler_params=_mosaic_params(("parallel", "parallel")),
    )(x3, sums, sqs)


def instance_norm_nhwc(x, residual=None, relu=True, eps=1e-5,
                       out_dtype=jnp.bfloat16):
    """InstanceNorm2d (affine=False) + optional pre-norm residual add + ReLU,
    run on the lane-dense channel-padded NHWC layout."""
    Nb, H, W, C = x.shape
    x3 = x.reshape(Nb, H * W, C)
    if residual is not None:
        # TODO(synk): chunked two-pass variant with fused residual for very
        # large residual blocks; at ResBlock sizes the fused path fits VMEM.
        r3 = residual.reshape(Nb, H * W, C)
        y3 = _instance_norm_fused(x3, r3, relu, eps, out_dtype)
    elif H * W * C * x.dtype.itemsize <= _IN_FUSED_MAX_BYTES:
        y3 = _instance_norm_fused(x3, None, relu, eps, out_dtype)
    else:
        y3 = _instance_norm_chunked(x3, relu, eps, out_dtype)
    return y3.reshape(Nb, H, W, C)


# ----------------------------------------------------------------------------
# im2col conv path (only for the stride-2 convs and the 1-channel head conv)
# ----------------------------------------------------------------------------
def _im2col(x, kH, kW, stride):
    N, H, W, C = x.shape
    Ho = (H - kH) // stride + 1
    Wo = (W - kW) // stride + 1
    cols = []
    for i in range(kH):
        for j in range(kW):
            cols.append(x[:, i:i + (Ho - 1) * stride + 1:stride,
                             j:j + (Wo - 1) * stride + 1:stride, :])
    patches = jnp.stack(cols, axis=3).reshape(N * Ho * Wo, kH * kW * C)
    return patches, Ho, Wo


def conv2d_im2col(x, w, b, *, stride, pad, activation="none"):
    Nb = x.shape[0]
    Cout, Cin, kH, kW = w.shape
    if x.shape[-1] > Cin:
        x = x[..., :Cin]            # drop channel padding before 9x/49x im2col
    if pad:
        x = jnp.pad(x, ((0, 0), (pad, pad), (pad, pad), (0, 0)))
    patches, Ho, Wo = _im2col(x.astype(jnp.bfloat16), kH, kW, stride)
    w2 = jnp.transpose(w, (2, 3, 1, 0)).reshape(kH * kW * Cin, Cout)
    y = matmul_bias(patches, w2, b, activation=activation)
    return y.reshape(Nb, Ho, Wo, y.shape[-1])


# ----------------------------------------------------------------------------
# Layout glue (plain JAX)
# ----------------------------------------------------------------------------
def conv_transpose_s1p1(x, wt, b):
    """ConvTranspose2d(k=3, s=1, p=1) == Conv2d with flipped, swapped weights."""
    Cin, Cout, kH, kW = wt.shape
    w = jnp.transpose(wt[:, :, ::-1, ::-1], (1, 0, 2, 3))     # (Cout,Cin,kH,kW)
    return conv2d_direct(x, w, b, pad=kH - 1 - 1)


def pixel_shuffle(x, r):
    """NHWC pixel shuffle matching torch.nn.PixelShuffle semantics."""
    N, H, W, Crr = x.shape
    C = Crr // (r * r)
    x = x.reshape(N, H, W, C, r, r)
    x = jnp.transpose(x, (0, 1, 4, 2, 5, 3))
    return x.reshape(N, H * r, W * r, C)


def reflection_pad(x, p):
    return jnp.pad(x, ((0, 0), (p, p), (p, p), (0, 0)), mode="reflect")


def pad_channels(x, mult=_LANE):
    C = x.shape[-1]
    Cp = _round_up(C, mult)
    if Cp == C:
        return x
    return jnp.pad(x, ((0, 0), (0, 0), (0, 0), (0, Cp - C)))


# ----------------------------------------------------------------------------
# Parameter init (deterministic, PyTorch-default-style uniform bounds)
# ----------------------------------------------------------------------------
def _uniform(key, shape, fan_in):
    bound = 1.0 / math.sqrt(fan_in)
    return jax.random.uniform(key, shape, jnp.float32, -bound, bound)


def init_generator_params(key, f, blocks):
    keys = iter(jax.random.split(key, 64))
    p = {}

    def conv_param(name, cout, cin, k):
        fan_in = cin * k * k
        p[name + "_w"] = _uniform(next(keys), (cout, cin, k, k), fan_in)
        p[name + "_b"] = _uniform(next(keys), (cout,), fan_in)

    def convT_param(name, cin, cout, k):
        fan_in = cout * k * k      # torch fan_in for ConvTranspose2d weights
        p[name + "_w"] = _uniform(next(keys), (cin, cout, k, k), fan_in)
        p[name + "_b"] = _uniform(next(keys), (cout,), fan_in)

    conv_param("c1", f, 1, 7)
    conv_param("c2", 2 * f, f, 3)
    conv_param("c3", 4 * f, 2 * f, 3)
    for k in range(blocks):
        conv_param(f"rb{k}_1", 4 * f, 4 * f, 3)
        conv_param(f"rb{k}_2", 4 * f, 4 * f, 3)
    convT_param("t1", 4 * f, 8 * f, 3)
    convT_param("t2", 2 * f, 4 * f, 3)
    conv_param("co", 1, f, 7)
    return p


# ----------------------------------------------------------------------------
# Generator forward
# ----------------------------------------------------------------------------
def generator_forward(x_nchw, params, blocks):
    f = params["c1_w"].shape[0]
    x = jnp.transpose(x_nchw, (0, 2, 3, 1)).astype(jnp.float32)     # -> NHWC

    # Head: ReflectionPad(3) -> Conv7x7 -> IN -> ReLU
    x = reflection_pad(x, 3)
    x = conv2d_im2col(x, params["c1_w"], params["c1_b"], stride=1, pad=0)
    x = instance_norm_nhwc(x)

    # Downsample x2 (stride-2 convs stay on the im2col path)
    x = conv2d_im2col(x, params["c2_w"], params["c2_b"], stride=2, pad=1)
    x = instance_norm_nhwc(x)
    x = conv2d_im2col(x, params["c3_w"], params["c3_b"], stride=2, pad=1)
    x = instance_norm_nhwc(x)

    # Residual blocks: relu(IN(conv2(relu(IN(conv1(x)))) + x))
    for k in range(blocks):
        r = x
        h = conv2d_direct(x, params[f"rb{k}_1_w"], params[f"rb{k}_1_b"], pad=1)
        h = instance_norm_nhwc(h)
        h = conv2d_direct(h, params[f"rb{k}_2_w"], params[f"rb{k}_2_b"], pad=1)
        x = instance_norm_nhwc(h, residual=r)

    # Upsample path: ConvT(s=1,p=1) -> PixelShuffle(2) -> IN -> ReLU (x2)
    x = conv_transpose_s1p1(x, params["t1_w"], params["t1_b"])
    x = pixel_shuffle(x[..., : 8 * f], 2)
    x = instance_norm_nhwc(pad_channels(x))
    x = conv_transpose_s1p1(x, params["t2_w"], params["t2_b"])
    x = pixel_shuffle(x[..., : 4 * f], 2)
    x = instance_norm_nhwc(pad_channels(x))

    # Tail: ReflectionPad(3) -> Conv7x7 -> Tanh (tanh fused in the conv epilogue)
    x = reflection_pad(x, 3)
    x = conv2d_direct(x, params["co_w"], params["co_b"], pad=0,
                      activation="tanh")
    x = x[..., :1]
    return jnp.transpose(x, (0, 3, 1, 2)).astype(jnp.float32)       # -> NCHW


# ----------------------------------------------------------------------------
if __name__ == "__main__":
    f = 4        # filters in the first conv layer
    blocks = 2   # residual blocks

    key = jax.random.PRNGKey(0)
    k_params, k_x, k_chk = jax.random.split(key, 3)
    params = init_generator_params(k_params, f, blocks)
    x = jax.random.normal(k_x, (2, 1, 16, 16), jnp.float32)   # NCHW, like torch

    # Exercise the chunked two-pass InstanceNorm path (used for production-size
    # images) against the fused single-block kernel.
    xc = jax.random.normal(k_chk, (2, 512, 128), jnp.float32).astype(jnp.bfloat16)
    y_fused = _instance_norm_fused(xc, None, True, 1e-5, jnp.float32)
    y_chunk = _instance_norm_chunked(xc, True, 1e-5, jnp.float32,
                                     max_chunk_elems=128)
    assert bool(jnp.allclose(y_fused, y_chunk, atol=3e-2, rtol=3e-2)), \
        "chunked IN mismatch"

    fwd = jax.jit(functools.partial(generator_forward, blocks=blocks))
    out = jax.block_until_ready(fwd(x, params))

    assert out.shape == (2, 1, 16, 16), out.shape
    assert bool(jnp.all(jnp.isfinite(out)))
    assert bool(jnp.all(jnp.abs(out) <= 1.0 + 1e-6))   # tanh range
    print("KERNEL_OK")
</pallas_src>

<mosaic_0001>
module attributes {stable_mosaic.version = 11 : i64} {
  func.func @_inorm_fused_kernel(%arg0: i32, %arg1: memref<1x512x128xbf16, #tpu.memory_space<vmem>>, %arg2: memref<1x512x128xf32, #tpu.memory_space<vmem>>) attributes {dimension_semantics = [#tpu.dimension_semantics<parallel>], iteration_bounds = array<i64: 2>, scalar_prefetch = 0 : i64, scratch_operands = 0 : i64, tpu.core_type = #tpu.core_type<tc>, window_params = [{transform_indices = @transform_0, window_bounds = array<i64: 1, 512, 128>}, {transform_indices = @transform_1, window_bounds = array<i64: 1, 512, 128>}]} {
    %c0 = arith.constant 0 : index
    %c0_0 = arith.constant 0 : index
    %c0_1 = arith.constant 0 : index
    %0 = vector.load %arg1[%c0, %c0_0, %c0_1] : memref<1x512x128xbf16, #tpu.memory_space<vmem>>, vector<1x512x128xbf16>
    %1 = arith.extf %0 : vector<1x512x128xbf16> to vector<1x512x128xf32>
    %cst = arith.constant dense<0.000000e+00> : vector<1x128xf32>
    %2 = vector.multi_reduction <add>, %1, %cst [1] : vector<1x512x128xf32> to vector<1x128xf32>
    %3 = vector.shape_cast %2 : vector<1x128xf32> to vector<1x1x128xf32>
    %cst_2 = arith.constant 5.120000e+02 : f32
    %4 = vector.broadcast %cst_2 : f32 to vector<1x1x128xf32>
    %5 = arith.divf %3, %4 : vector<1x1x128xf32>
    %6 = vector.broadcast %5 : vector<1x1x128xf32> to vector<1x512x128xf32>
    %7 = arith.subf %1, %6 : vector<1x512x128xf32>
    %8 = arith.mulf %7, %7 : vector<1x512x128xf32>
    %cst_3 = arith.constant dense<0.000000e+00> : vector<1x128xf32>
    %9 = vector.multi_reduction <add>, %8, %cst_3 [1] : vector<1x512x128xf32> to vector<1x128xf32>
    %10 = vector.shape_cast %9 : vector<1x128xf32> to vector<1x1x128xf32>
    %cst_4 = arith.constant 5.120000e+02 : f32
    %11 = vector.broadcast %cst_4 : f32 to vector<1x1x128xf32>
    %12 = arith.divf %10, %11 : vector<1x1x128xf32>
    %cst_5 = arith.constant 9.99999974E-6 : f32
    %13 = vector.broadcast %cst_5 : f32 to vector<1x1x128xf32>
    %14 = arith.addf %12, %13 : vector<1x1x128xf32>
    %15 = math.rsqrt %14 : vector<1x1x128xf32>
    %16 = vector.broadcast %15 : vector<1x1x128xf32> to vector<1x512x128xf32>
    %17 = arith.mulf %7, %16 : vector<1x512x128xf32>
    %cst_6 = arith.constant 0.000000e+00 : f32
    %18 = vector.broadcast %cst_6 : f32 to vector<1x512x128xf32>
    %19 = arith.maximumf %17, %18 : vector<1x512x128xf32>
    %c0_7 = arith.constant 0 : index
    %c0_8 = arith.constant 0 : index
    %c0_9 = arith.constant 0 : index
    %20 = vector.load %arg2[%c0_7, %c0_8, %c0_9] : memref<1x512x128xf32, #tpu.memory_space<vmem>>, vector<1x512x128xf32>
    tpu.vector_store %arg2[%c0_7, %c0_8, %c0_9], %19 {strides = array<i32>} : memref<1x512x128xf32, #tpu.memory_space<vmem>>, vector<1x512x128xf32>,
    return
  }
  func.func @transform_0(%arg0: i32) -> (i32, i32, i32) {
    %c0_i32 = arith.constant 0 : i32
    %c0_i32_0 = arith.constant 0 : i32
    %c0_i32_1 = arith.constant 0 : i32
    return %arg0, %c0_i32, %c0_i32_0 : i32, i32, i32
  }
  func.func @transform_1(%arg0: i32) -> (i32, i32, i32) {
    %c0_i32 = arith.constant 0 : i32
    %c0_i32_0 = arith.constant 0 : i32
    %c0_i32_1 = arith.constant 0 : i32
    return %arg0, %c0_i32, %c0_i32_0 : i32, i32, i32
  }
}

</mosaic_0001>

<llo_original>
// kernel: tpu_custom_call.1
$region0: #{tpu_custom_call.1}
  #allocation0 [shape = 'u32[]', space=smem, size = 0x4, offset = 0x4, fixed_abs, tag = 'smem constant byte address 0x4 - core index']
  #allocation1 [shape = 'u32[144,128]{1,0:T(1,128)}', space=vmem, size = 0x12000, scoped, tag = 'internal scratch']
  %s0 = inlined_call_operand.hbm [shape: bf16[2,512,128], index: 0, kind: input, shape index: {}]
  %s1 = inlined_call_operand.hbm [shape: f32[2,512,128], index: 1, kind: output, shape index: {}]
  %s2 = sld [smem:[#allocation0]]
  $region41: #{tpu_custom_call.1} parent=0
    _
  %s4 = ssub.s32 1, %s2
  %s5 = scalar_select 0, %s4, %s2
  $region1: #{tpu_custom_call.1} parent=0
    #allocation2 [shape = 'u8[262144]{0}', space=vmem, size = 0x40000, scoped, tag = 'input window, operand 0']
    #allocation3 [shape = 's32[2]{0}', space=sflag, size = 0x8, scoped, tag = 'scoped memory for tpu_custom_call.1']
    #allocation4 [shape = 's32[2]{0}', space=sflag, size = 0x8, scoped, tag = 'scoped memory for tpu_custom_call.1']
    #allocation5 [shape = 'u8[524288]{0}', space=vmem, size = 0x80000, scoped, tag = 'output window, operand 0']
    %6 = vsyncpa [#allocation3], 0
    %s7 = scalar_lea.sflag [#allocation3], 1
    %8 = vsyncpa %s7, 0
    %9 = vsyncpa [#allocation4], 0
    %s10 = scalar_lea.sflag [#allocation4], 1
    %11 = vsyncpa %s10, 0
    loop: start=0, step=1, limit=4
    $region2: #{tpu_custom_call.1} parent=1 // loop_pre_header
      _
    $region3: #{tpu_custom_call.1} parent=1 // loop_header
      %s13 = sphi 0, %s17
      %p14 = scmp.ge.s32.totalorder %s13, 4
      %s23 = sphi 0, %s25
      %s26 = sphi 0, %s23
      %s27 = sphi 0, %s26
      %s43 = sphi 0, %s27
      %s49 = sphi 0, %s51
      %s52 = sphi 0, %s49
      %s53 = sphi 0, %s52
      %s69 = sphi 0, %s53
    $region4: #{tpu_custom_call.1} parent=1 // loop_header_branch
      %16 = sbr.rel (%p14) target = $region8
    $region5: #{tpu_custom_call.1} parent=1 // loop_body
      %s18 = ssub.s32 %s13, 1
      %s19 = ssub.s32 %s13, 2
      %s20 = sadd.s32 %s13, 1
      %s21 = ssub.s32 %s13, %s20
      %p22 = scmp.eq.s32.totalorder %s21, 0
      %s24 = sadd.s32 %s23, 1
      %s25 = scalar_select %p22, %s23, %s24
      %p28 = pneg %p22
      %p29 = scmp.eq.s32.totalorder %s13, 1
      %p30 = por %p28, %p29
      %p31 = scmp.ne.s32.totalorder %s23, %s26
      %p32 = scmp.eq.s32.totalorder %s13, 0
      %p33 = por %p31, %p32
      %p34 = scmp.ne.s32.totalorder %s23, %s26
      %p35 = scmp.eq.s32.totalorder %s18, 1
      %p36 = por %p34, %p35
      %p37 = scmp.ne.s32.totalorder %s26, %s27
      %p38 = scmp.eq.s32.totalorder %s18, 0
      %p39 = por %p37, %p38
      %p40 = scmp.ne.s32.totalorder %s26, %s27
      %p41 = scmp.eq.s32.totalorder %s19, 1
      %p42 = por %p40, %p41
      %p44 = scmp.ne.s32.totalorder %s27, %s43
      %p45 = scmp.eq.s32.totalorder %s19, 0
      %p46 = por %p44, %p45
      %s47 = ssub.s32 %s13, %s20
      %p48 = scmp.eq.s32.totalorder %s47, 0
      %s50 = sadd.s32 %s49, 1
      %s51 = scalar_select %p48, %s49, %s50
      %p54 = pneg %p48
      %p55 = scmp.eq.s32.totalorder %s13, 1
      %p56 = por %p54, %p55
      %p57 = scmp.ne.s32.totalorder %s49, %s52
      %p58 = scmp.eq.s32.totalorder %s13, 0
      %p59 = por %p57, %p58
      %p60 = scmp.ne.s32.totalorder %s49, %s52
      %p61 = scmp.eq.s32.totalorder %s18, 1
      %p62 = por %p60, %p61
      %p63 = scmp.ne.s32.totalorder %s52, %s53
      %p64 = scmp.eq.s32.totalorder %s18, 0
      %p65 = por %p63, %p64
      %p66 = scmp.ne.s32.totalorder %s52, %s53
      %p67 = scmp.eq.s32.totalorder %s19, 1
      %p68 = por %p66, %p67
      %p70 = scmp.ne.s32.totalorder %s53, %s69
      %p71 = scmp.eq.s32.totalorder %s19, 0
      %p72 = por %p70, %p71
      %p73 = scmp.le.s32.totalorder 1, %s13
      %p74 = scmp.lt.s32.totalorder %s13, 3
      %p75 = pnand %p73, %p74
      %p76 = pneg %p75
      // Predicated region
      $region9: #{tpu_custom_call.1} parent=5 // pred_check
        _
      $region10: #{tpu_custom_call.1} parent=5 // pred_check_branch
        %78 = sbr.rel (%p75) target = $region12
      $region11: #{tpu_custom_call.1} parent=5 // pred_region
        %s79 = ssub.s32 %s13, 1
      $region12: #{tpu_custom_call.1} parent=5 // pred_fallthru
        _
      %p80 = scmp.lt.s32.totalorder %s13, 2
      // Predicated region
      $region13: #{tpu_custom_call.1} parent=5 // pred_check
        %p81 = pneg %p80
      $region14: #{tpu_custom_call.1} parent=5 // pred_check_branch
        %83 = sbr.rel (%p81) target = $region16
      $region15: #{tpu_custom_call.1} parent=5 // pred_region
        // Predicated region
        $region17: #{tpu_custom_call.1} parent=15 // pred_check
          %p84 = pneg %p33
        $region18: #{tpu_custom_call.1} parent=15 // pred_check_branch
          %86 = sbr.rel (%p84) target = $region20
        $region19: #{tpu_custom_call.1} parent=15 // pred_region
          %s87 = sand.u32 %s23, 1
          %s88 = scalar_lea.sflag [#allocation3], %s87
          %s89 = sand.u32 %s23, 1
          %s90 = smul.addr %s89, 256
          %s91 = scalar_lea.vmem [#allocation2], %s90
          %s93 = ssub.s32 4096, 4096
          %94 = vsyncadd %s88, %s93
          %s95 = smul.addr %s13, 64
          %s96 = smul.addr %s95, 64
          %s97 = scalar_lea.hbm %s0, %s96
          %s98 = sshll.u32 %s91, 4
          %s99 = int_to_ptr.vmem [resolvable:$true] %s98
          %104 = dma.hbm_to_vmem [thread:$0]  %s97, 4096, %s99, %s88, 64, 64, 4
        $region20: #{tpu_custom_call.1} parent=15 // pred_fallthru
          _
      $region16: #{tpu_custom_call.1} parent=5 // pred_fallthru
        _
      %p105 = scmp.le.s32.totalorder 1, %s13
      %p106 = scmp.lt.s32.totalorder %s13, 3
      %p107 = pnand %p105, %p106
      %p108 = pneg %p107
      // Predicated region
      $region21: #{tpu_custom_call.1} parent=5 // pred_check
        _
      $region22: #{tpu_custom_call.1} parent=5 // pred_check_branch
        %110 = sbr.rel (%p107) target = $region24
      $region23: #{tpu_custom_call.1} parent=5 // pred_region
        %s111 = ssub.s32 %s13, 1
        %s112 = sand.u32 %s26, 1
        %s113 = scalar_lea.sflag [#allocation3], %s112
        %s114 = sand.u32 %s26, 1
        %s115 = smul.addr %s114, 256
        %s116 = scalar_lea.vmem [#allocation2], %s115
        // Predicated region
        $region25: #{tpu_custom_call.1} parent=23 // pred_check
          %p117 = pneg %p39
        $region26: #{tpu_custom_call.1} parent=23 // pred_check_branch
          %119 = sbr.rel (%p117) target = $region28
        $region27: #{tpu_custom_call.1} parent=23 // pred_region
          %120 = dma.done %s113, 4096
        $region28: #{tpu_custom_call.1} parent=23 // pred_fallthru
          _
        %s121 = sand.u32 %s26, 1
        %s122 = scalar_lea.sflag [#allocation3], %s121
        %s123 = sand.u32 %s26, 1
        %s124 = smul.addr %s123, 256
        %s125 = scalar_lea.vmem [#allocation2], %s124
        %p126 = pneg %p39
        %p127 = pneg %p36
        %p128 = pneg %p65
        %p129 = pneg %p62
        %s130 = sand.u32 %s52, 1
        %s131 = scalar_lea.sflag [#allocation4], %s130
        %s132 = sand.u32 %s52, 1
        %s133 = smul.addr %s132, 512
        %s134 = scalar_lea.vmem [#allocation5], %s133
        %v135 = vld [vmem:[%s116] sm:$0xf]
        %v136 = vld [vmem:[%s116 + $0x4] sm:$0xf]
        %v137 = vld [vmem:[%s116 + $0x8] sm:$0xf]
        %v138 = vld [vmem:[%s116 + $0xc] sm:$0xf]
        %v139 = vld [vmem:[%s116 + $0x10] sm:$0xf]
        %v140 = vld [vmem:[%s116 + $0x14] sm:$0xf]
        %v141 = vld [vmem:[%s116 + $0x18] sm:$0xf]
        %v142 = vld [vmem:[%s116 + $0x1c] sm:$0xf]
        %v143 = vld [vmem:[%s116 + $0x20] sm:$0xf]
        %v144 = vld [vmem:[%s116 + $0x24] sm:$0xf]
        %v145 = vld [vmem:[%s116 + $0x28] sm:$0xf]
        %v146 = vld [vmem:[%s116 + $0x2c] sm:$0xf]
        %v147 = vld [vmem:[%s116 + $0x30] sm:$0xf]
        %v148 = vld [vmem:[%s116 + $0x34] sm:$0xf]
        %v149 = vld [vmem:[%s116 + $0x38] sm:$0xf]
        %v150 = vld [vmem:[%s116 + $0x3c] sm:$0xf]
        %v151 = vld [vmem:[%s116 + $0x40] sm:$0xf]
        %v152 = vld [vmem:[%s116 + $0x44] sm:$0xf]
        %v153 = vld [vmem:[%s116 + $0x48] sm:$0xf]
        %v154 = vld [vmem:[%s116 + $0x4c] sm:$0xf]
        %v155 = vld [vmem:[%s116 + $0x50] sm:$0xf]
        %v156 = vld [vmem:[%s116 + $0x54] sm:$0xf]
        %v157 = vld [vmem:[%s116 + $0x58] sm:$0xf]
        %v158 = vld [vmem:[%s116 + $0x5c] sm:$0xf]
        %v159 = vld [vmem:[%s116 + $0x60] sm:$0xf]
        %v160 = vld [vmem:[%s116 + $0x64] sm:$0xf]
        %v161 = vld [vmem:[%s116 + $0x68] sm:$0xf]
        %v162 = vld [vmem:[%s116 + $0x6c] sm:$0xf]
        %v163 = vld [vmem:[%s116 + $0x70] sm:$0xf]
        %v164 = vld [vmem:[%s116 + $0x74] sm:$0xf]
        %v165 = vld [vmem:[%s116 + $0x78] sm:$0xf]
        %v166 = vld [vmem:[%s116 + $0x7c] sm:$0xf]
        %v167 = vld [vmem:[%s116 + $0x80] sm:$0xf]
        %v168 = vld [vmem:[%s116 + $0x84] sm:$0xf]
        %v169 = vld [vmem:[%s116 + $0x88] sm:$0xf]
        %v170 = vld [vmem:[%s116 + $0x8c] sm:$0xf]
        %v171 = vld [vmem:[%s116 + $0x90] sm:$0xf]
        %v172 = vld [vmem:[%s116 + $0x94] sm:$0xf]
        %v173 = vld [vmem:[%s116 + $0x98] sm:$0xf]
        %v174 = vld [vmem:[%s116 + $0x9c] sm:$0xf]
        %v175 = vld [vmem:[%s116 + $0xa0] sm:$0xf]
        %v176 = vld [vmem:[%s116 + $0xa4] sm:$0xf]
        %v177 = vld [vmem:[%s116 + $0xa8] sm:$0xf]
        %v178 = vld [vmem:[%s116 + $0xac] sm:$0xf]
        %v179 = vld [vmem:[%s116 + $0xb0] sm:$0xf]
        %v180 = vld [vmem:[%s116 + $0xb4] sm:$0xf]
        %v181 = vld [vmem:[%s116 + $0xb8] sm:$0xf]
        %v182 = vld [vmem:[%s116 + $0xbc] sm:$0xf]
        %v183 = vld [vmem:[%s116 + $0xc0] sm:$0xf]
        %v184 = vld [vmem:[%s116 + $0xc4] sm:$0xf]
        %v185 = vld [vmem:[%s116 + $0xc8] sm:$0xf]
        %v186 = vld [vmem:[%s116 + $0xcc] sm:$0xf]
        %v187 = vld [vmem:[%s116 + $0xd0] sm:$0xf]
        %v188 = vld [vmem:[%s116 + $0xd4] sm:$0xf]
        %v189 = vld [vmem:[%s116 + $0xd8] sm:$0xf]
        %v190 = vld [vmem:[%s116 + $0xdc] sm:$0xf]
        %v191 = vld [vmem:[%s116 + $0xe0] sm:$0xf]
        %v192 = vld [vmem:[%s116 + $0xe4] sm:$0xf]
        %v193 = vld [vmem:[%s116 + $0xe8] sm:$0xf]
        %v194 = vld [vmem:[%s116 + $0xec] sm:$0xf]
        %v195 = vld [vmem:[%s116 + $0xf0] sm:$0xf]
        %v196 = vld [vmem:[%s116 + $0xf4] sm:$0xf]
        %v197 = vld [vmem:[%s116 + $0xf8] sm:$0xf]
        %v198 = vld [vmem:[%s116 + $0xfc] sm:$0xf]
        %v199 = vunpack.c.l.bf16 %v135
        %v200 = vunpack.c.l.bf16 %v136
        %v201 = vunpack.c.l.bf16 %v137
        %v202 = vunpack.c.l.bf16 %v138
        %v203 = vunpack.c.l.bf16 %v139
        %v204 = vunpack.c.l.bf16 %v140
        %v205 = vunpack.c.l.bf16 %v141
        %v206 = vunpack.c.l.bf16 %v142
        %v207 = vunpack.c.l.bf16 %v143
        %v208 = vunpack.c.l.bf16 %v144
        %v209 = vunpack.c.l.bf16 %v145
        %v210 = vunpack.c.l.bf16 %v146
        %v211 = vunpack.c.l.bf16 %v147
        %v212 = vunpack.c.l.bf16 %v148
        %v213 = vunpack.c.l.bf16 %v149
        %v214 = vunpack.c.l.bf16 %v150
        %v215 = vunpack.c.l.bf16 %v151
        %v216 = vunpack.c.l.bf16 %v152
        %v217 = vunpack.c.l.bf16 %v153
        %v218 = vunpack.c.l.bf16 %v154
        %v219 = vunpack.c.l.bf16 %v155
        %v220 = vunpack.c.l.bf16 %v156
        %v221 = vunpack.c.l.bf16 %v157
        %v222 = vunpack.c.l.bf16 %v158
        %v223 = vunpack.c.l.bf16 %v159
        %v224 = vunpack.c.l.bf16 %v160
        %v225 = vunpack.c.l.bf16 %v161
        %v226 = vunpack.c.l.bf16 %v162
        %v227 = vunpack.c.l.bf16 %v163
        %v228 = vunpack.c.l.bf16 %v164
        %v229 = vunpack.c.l.bf16 %v165
        %v230 = vunpack.c.l.bf16 %v166
        %v231 = vunpack.c.l.bf16 %v167
        %v232 = vunpack.c.l.bf16 %v168
        %v233 = vunpack.c.l.bf16 %v169
        %v234 = vunpack.c.l.bf16 %v170
        %v235 = vunpack.c.l.bf16 %v171
        %v236 = vunpack.c.l.bf16 %v172
        %v237 = vunpack.c.l.bf16 %v173
        %v238 = vunpack.c.l.bf16 %v174
        %v239 = vunpack.c.l.bf16 %v175
        %v240 = vunpack.c.l.bf16 %v176
        %v241 = vunpack.c.l.bf16 %v177
        %v242 = vunpack.c.l.bf16 %v178
        %v243 = vunpack.c.l.bf16 %v179
        %v244 = vunpack.c.l.bf16 %v180
        %v245 = vunpack.c.l.bf16 %v181
        %v246 = vunpack.c.l.bf16 %v182
        %v247 = vunpack.c.l.bf16 %v183
        %v248 = vunpack.c.l.bf16 %v184
        %v249 = vunpack.c.l.bf16 %v185
        %v250 = vunpack.c.l.bf16 %v186
        %v251 = vunpack.c.l.bf16 %v187
        %v252 = vunpack.c.l.bf16 %v188
        %v253 = vunpack.c.l.bf16 %v189
        %v254 = vunpack.c.l.bf16 %v190
        %v255 = vunpack.c.l.bf16 %v191
        %v256 = vunpack.c.l.bf16 %v192
        %v257 = vunpack.c.l.bf16 %v193
        %v258 = vunpack.c.l.bf16 %v194
        %v259 = vunpack.c.l.bf16 %v195
        %v260 = vunpack.c.l.bf16 %v196
        %v261 = vunpack.c.l.bf16 %v197
        %v262 = vunpack.c.l.bf16 %v198
        %v263 = vadd.f32 %v199, %v200
        %v264 = vadd.f32 %v263, %v201
        %v265 = vadd.f32 %v264, %v202
        %v266 = vadd.f32 %v265, %v203
        %v267 = vadd.f32 %v266, %v204
        %v268 = vadd.f32 %v267, %v205
        %v269 = vadd.f32 %v268, %v206
        %v270 = vadd.f32 %v269, %v207
        %v271 = vadd.f32 %v270, %v208
        %v272 = vadd.f32 %v271, %v209
        %v273 = vadd.f32 %v272, %v210
        %v274 = vadd.f32 %v273, %v211
        %v275 = vadd.f32 %v274, %v212
        %v276 = vadd.f32 %v275, %v213
        %v277 = vadd.f32 %v276, %v214
        %v278 = vadd.f32 %v277, %v215
        %v279 = vadd.f32 %v278, %v216
        %v280 = vadd.f32 %v279, %v217
        %v281 = vadd.f32 %v280, %v218
        %v282 = vadd.f32 %v281, %v219
        %v283 = vadd.f32 %v282, %v220
        %v284 = vadd.f32 %v283, %v221
        %v285 = vadd.f32 %v284, %v222
        %v286 = vadd.f32 %v285, %v223
        %v287 = vadd.f32 %v286, %v224
        %v288 = vadd.f32 %v287, %v225
        %v289 = vadd.f32 %v288, %v226
        %v290 = vadd.f32 %v289, %v227
        %v291 = vadd.f32 %v290, %v228
        %v292 = vadd.f32 %v291, %v229
        %v293 = vadd.f32 %v292, %v230
        %v294 = vadd.f32 %v293, %v231
        %v295 = vadd.f32 %v294, %v232
        %v296 = vadd.f32 %v295, %v233
        %v297 = vadd.f32 %v296, %v234
        %v298 = vadd.f32 %v297, %v235
        %v299 = vadd.f32 %v298, %v236
        %v300 = vadd.f32 %v299, %v237
        %v301 = vadd.f32 %v300, %v238
        %v302 = vadd.f32 %v301, %v239
        %v303 = vadd.f32 %v302, %v240
        %v304 = vadd.f32 %v303, %v241
        %v305 = vadd.f32 %v304, %v242
        %v306 = vadd.f32 %v305, %v243
        %v307 = vadd.f32 %v306, %v244
        %v308 = vadd.f32 %v307, %v245
        %v309 = vadd.f32 %v308, %v246
        %v310 = vadd.f32 %v309, %v247
        %v311 = vadd.f32 %v310, %v248
        %v312 = vadd.f32 %v311, %v249
        %v313 = vadd.f32 %v312, %v250
        %v314 = vadd.f32 %v313, %v251
        %v315 = vadd.f32 %v314, %v252
        %v316 = vadd.f32 %v315, %v253
        %v317 = vadd.f32 %v316, %v254
        %v318 = vadd.f32 %v317, %v255
        %v319 = vadd.f32 %v318, %v256
        %v320 = vadd.f32 %v319, %v257
        %v321 = vadd.f32 %v320, %v258
        %v322 = vadd.f32 %v321, %v259
        %v323 = vadd.f32 %v322, %v260
        %v324 = vadd.f32 %v323, %v261
        %v325 = vadd.f32 %v324, %v262
        %v326 = vrot.slane %v325, 4
        %v327 = vadd.f32 %v325, %v326
        %v328 = vrot.slane %v327, 2
        %v329 = vadd.f32 %v327, %v328
        %v330 = vrot.slane %v329, 1
        %v331 = vadd.f32 %v329, %v330
        %v332 = vrcp.pop 512.0
        %v333 = vmul.f32 %v331, %v332
        %v334 = vsub.f32 %v199, %v333
        %v335 = vsub.f32 %v200, %v333
        %v336 = vsub.f32 %v201, %v333
        %v337 = vsub.f32 %v202, %v333
        %v338 = vsub.f32 %v203, %v333
        %v339 = vsub.f32 %v204, %v333
        %v340 = vsub.f32 %v205, %v333
        %v341 = vsub.f32 %v206, %v333
        %v342 = vsub.f32 %v207, %v333
        %v343 = vsub.f32 %v208, %v333
        %v344 = vsub.f32 %v209, %v333
        %v345 = vsub.f32 %v210, %v333
        %v346 = vsub.f32 %v211, %v333
        %v347 = vsub.f32 %v212, %v333
        %v348 = vsub.f32 %v213, %v333
        %v349 = vsub.f32 %v214, %v333
        %v350 = vsub.f32 %v215, %v333
        %v351 = vsub.f32 %v216, %v333
        %v352 = vsub.f32 %v217, %v333
        %v353 = vsub.f32 %v218, %v333
        %v354 = vsub.f32 %v219, %v333
        %v355 = vsub.f32 %v220, %v333
        %v356 = vsub.f32 %v221, %v333
        %v357 = vsub.f32 %v222, %v333
        %v358 = vsub.f32 %v223, %v333
        %v359 = vsub.f32 %v224, %v333
        %v360 = vsub.f32 %v225, %v333
        %v361 = vsub.f32 %v226, %v333
        %v362 = vsub.f32 %v227, %v333
        %v363 = vsub.f32 %v228, %v333
        %v364 = vsub.f32 %v229, %v333
        %v365 = vsub.f32 %v230, %v333
        %v366 = vsub.f32 %v231, %v333
        %v367 = vsub.f32 %v232, %v333
        %v368 = vsub.f32 %v233, %v333
        %v369 = vsub.f32 %v234, %v333
        %v370 = vsub.f32 %v235, %v333
        %v371 = vsub.f32 %v236, %v333
        %v372 = vsub.f32 %v237, %v333
        %v373 = vsub.f32 %v238, %v333
        %v374 = vsub.f32 %v239, %v333
        %v375 = vsub.f32 %v240, %v333
        %v376 = vsub.f32 %v241, %v333
        %v377 = vsub.f32 %v242, %v333
        %v378 = vsub.f32 %v243, %v333
        %v379 = vsub.f32 %v244, %v333
        %v380 = vsub.f32 %v245, %v333
        %v381 = vsub.f32 %v246, %v333
        %v382 = vsub.f32 %v247, %v333
        %v383 = vsub.f32 %v248, %v333
        %v384 = vsub.f32 %v249, %v333
        %v385 = vsub.f32 %v250, %v333
        %v386 = vsub.f32 %v251, %v333
        %v387 = vsub.f32 %v252, %v333
        %v388 = vsub.f32 %v253, %v333
        %v389 = vsub.f32 %v254, %v333
        %v390 = vsub.f32 %v255, %v333
        %v391 = vsub.f32 %v256, %v333
        %v392 = vsub.f32 %v257, %v333
        %v393 = vsub.f32 %v258, %v333
        %v394 = vsub.f32 %v259, %v333
        %v395 = vsub.f32 %v260, %v333
        %v396 = vsub.f32 %v261, %v333
        %v397 = vsub.f32 %v262, %v333
        %v398 = vmul.f32 %v334, %v334
        %v399 = vmul.f32 %v335, %v335
        %v400 = vmul.f32 %v336, %v336
        %v401 = vmul.f32 %v337, %v337
        %v402 = vmul.f32 %v338, %v338
        %v403 = vmul.f32 %v339, %v339
        %v404 = vmul.f32 %v340, %v340
        %v405 = vmul.f32 %v341, %v341
        %v406 = vmul.f32 %v342, %v342
        %v407 = vmul.f32 %v343, %v343
        %v408 = vmul.f32 %v344, %v344
        %v409 = vmul.f32 %v345, %v345
        %v410 = vmul.f32 %v346, %v346
        %v411 = vmul.f32 %v347, %v347
        %v412 = vmul.f32 %v348, %v348
        %v413 = vmul.f32 %v349, %v349
        %v414 = vmul.f32 %v350, %v350
        %v415 = vmul.f32 %v351, %v351
        %v416 = vmul.f32 %v352, %v352
        %v417 = vmul.f32 %v353, %v353
        %v418 = vmul.f32 %v354, %v354
        %v419 = vmul.f32 %v355, %v355
        %v420 = vmul.f32 %v356, %v356
        %v421 = vmul.f32 %v357, %v357
        %v422 = vmul.f32 %v358, %v358
        %v423 = vmul.f32 %v359, %v359
        %v424 = vmul.f32 %v360, %v360
        %v425 = vmul.f32 %v361, %v361
        %v426 = vmul.f32 %v362, %v362
        %v427 = vmul.f32 %v363, %v363
        %v428 = vmul.f32 %v364, %v364
        %v429 = vmul.f32 %v365, %v365
        %v430 = vmul.f32 %v366, %v366
        %v431 = vmul.f32 %v367, %v367
        %v432 = vmul.f32 %v368, %v368
        %v433 = vmul.f32 %v369, %v369
        %v434 = vmul.f32 %v370, %v370
        %v435 = vmul.f32 %v371, %v371
        %v436 = vmul.f32 %v372, %v372
        %v437 = vmul.f32 %v373, %v373
        %v438 = vmul.f32 %v374, %v374
        %v439 = vmul.f32 %v375, %v375
        %v440 = vmul.f32 %v376, %v376
        %v441 = vmul.f32 %v377, %v377
        %v442 = vmul.f32 %v378, %v378
        %v443 = vmul.f32 %v379, %v379
        %v444 = vmul.f32 %v380, %v380
        %v445 = vmul.f32 %v381, %v381
        %v446 = vmul.f32 %v382, %v382
        %v447 = vmul.f32 %v383, %v383
        %v448 = vmul.f32 %v384, %v384
        %v449 = vmul.f32 %v385, %v385
        %v450 = vmul.f32 %v386, %v386
        %v451 = vmul.f32 %v387, %v387
        %v452 = vmul.f32 %v388, %v388
        %v453 = vmul.f32 %v389, %v389
        %v454 = vmul.f32 %v390, %v390
        %v455 = vmul.f32 %v391, %v391
        %v456 = vmul.f32 %v392, %v392
        %v457 = vmul.f32 %v393, %v393
        %v458 = vmul.f32 %v394, %v394
        %v459 = vmul.f32 %v395, %v395
        %v460 = vmul.f32 %v396, %v396
        %v461 = vmul.f32 %v397, %v397
        %v462 = vadd.f32 %v398, %v399
        %v463 = vadd.f32 %v462, %v400
        %v464 = vadd.f32 %v463, %v401
        %v465 = vadd.f32 %v464, %v402
        %v466 = vadd.f32 %v465, %v403
        %v467 = vadd.f32 %v466, %v404
        %v468 = vadd.f32 %v467, %v405
        %v469 = vadd.f32 %v468, %v406
        %v470 = vadd.f32 %v469, %v407
        %v471 = vadd.f32 %v470, %v408
        %v472 = vadd.f32 %v471, %v409
        %v473 = vadd.f32 %v472, %v410
        %v474 = vadd.f32 %v473, %v411
        %v475 = vadd.f32 %v474, %v412
        %v476 = vadd.f32 %v475, %v413
        %v477 = vadd.f32 %v476, %v414
        %v478 = vadd.f32 %v477, %v415
        %v479 = vadd.f32 %v478, %v416
        %v480 = vadd.f32 %v479, %v417
        %v481 = vadd.f32 %v480, %v418
        %v482 = vadd.f32 %v481, %v419
        %v483 = vadd.f32 %v482, %v420
        %v484 = vadd.f32 %v483, %v421
        %v485 = vadd.f32 %v484, %v422
        %v486 = vadd.f32 %v485, %v423
        %v487 = vadd.f32 %v486, %v424
        %v488 = vadd.f32 %v487, %v425
        %v489 = vadd.f32 %v488, %v426
        %v490 = vadd.f32 %v489, %v427
        %v491 = vadd.f32 %v490, %v428
        %v492 = vadd.f32 %v491, %v429
        %v493 = vadd.f32 %v492, %v430
        %v494 = vadd.f32 %v493, %v431
        %v495 = vadd.f32 %v494, %v432
        %v496 = vadd.f32 %v495, %v433
        %v497 = vadd.f32 %v496, %v434
        %v498 = vadd.f32 %v497, %v435
        %v499 = vadd.f32 %v498, %v436
        %v500 = vadd.f32 %v499, %v437
        %v501 = vadd.f32 %v500, %v438
        %v502 = vadd.f32 %v501, %v439
        %v503 = vadd.f32 %v502, %v440
        %v504 = vadd.f32 %v503, %v441
        %v505 = vadd.f32 %v504, %v442
        %v506 = vadd.f32 %v505, %v443
        %v507 = vadd.f32 %v506, %v444
        %v508 = vadd.f32 %v507, %v445
        %v509 = vadd.f32 %v508, %v446
        %v510 = vadd.f32 %v509, %v447
        %v511 = vadd.f32 %v510, %v448
        %v512 = vadd.f32 %v511, %v449
        %v513 = vadd.f32 %v512, %v450
        %v514 = vadd.f32 %v513, %v451
        %v515 = vadd.f32 %v514, %v452
        %v516 = vadd.f32 %v515, %v453
        %v517 = vadd.f32 %v516, %v454
        %v518 = vadd.f32 %v517, %v455
        %v519 = vadd.f32 %v518, %v456
        %v520 = vadd.f32 %v519, %v457
        %v521 = vadd.f32 %v520, %v458
        %v522 = vadd.f32 %v521, %v459
        %v523 = vadd.f32 %v522, %v460
        %v524 = vadd.f32 %v523, %v461
        %v525 = vrot.slane %v524, 4
        %v526 = vadd.f32 %v524, %v525
        %v527 = vrot.slane %v526, 2
        %v528 = vadd.f32 %v526, %v527
        %v529 = vrot.slane %v528, 1
        %v530 = vadd.f32 %v528, %v529
        %v531 = vmul.f32 %v530, %v332
        %v532 = vadd.f32 %v531, 1e-05
        %v533 = vrsqrt.pop %v532
        %v534 = vmul.f32 %v334, %v533
        %v535 = vmul.f32 %v335, %v533
        %v536 = vmul.f32 %v336, %v533
        %v537 = vmul.f32 %v337, %v533
        %v538 = vmul.f32 %v338, %v533
        %v539 = vmul.f32 %v339, %v533
        %v540 = vmul.f32 %v340, %v533
        %v541 = vmul.f32 %v341, %v533
        %v542 = vmul.f32 %v342, %v533
        %v543 = vmul.f32 %v343, %v533
        %v544 = vmul.f32 %v344, %v533
        %v545 = vmul.f32 %v345, %v533
        %v546 = vmul.f32 %v346, %v533
        %v547 = vmul.f32 %v347, %v533
        %v548 = vmul.f32 %v348, %v533
        %v549 = vmul.f32 %v349, %v533
        %v550 = vmul.f32 %v350, %v533
        %v551 = vmul.f32 %v351, %v533
        %v552 = vmul.f32 %v352, %v533
        %v553 = vmul.f32 %v353, %v533
        %v554 = vmul.f32 %v354, %v533
        %v555 = vmul.f32 %v355, %v533
        %v556 = vmul.f32 %v356, %v533
        %v557 = vmul.f32 %v357, %v533
        %v558 = vmul.f32 %v358, %v533
        %v559 = vmul.f32 %v359, %v533
        %v560 = vmul.f32 %v360, %v533
        %v561 = vmul.f32 %v361, %v533
        %v562 = vmul.f32 %v362, %v533
        %v563 = vmul.f32 %v363, %v533
        %v564 = vmul.f32 %v364, %v533
        %v565 = vmul.f32 %v365, %v533
        %v566 = vmul.f32 %v366, %v533
        %v567 = vmul.f32 %v367, %v533
        %v568 = vmul.f32 %v368, %v533
        %v569 = vmul.f32 %v369, %v533
        %v570 = vmul.f32 %v370, %v533
        %v571 = vmul.f32 %v371, %v533
        %v572 = vmul.f32 %v372, %v533
        %v573 = vmul.f32 %v373, %v533
        %v574 = vmul.f32 %v374, %v533
        %v575 = vmul.f32 %v375, %v533
        %v576 = vmul.f32 %v376, %v533
        %v577 = vmul.f32 %v377, %v533
        %v578 = vmul.f32 %v378, %v533
        %v579 = vmul.f32 %v379, %v533
        %v580 = vmul.f32 %v380, %v533
        %v581 = vmul.f32 %v381, %v533
        %v582 = vmul.f32 %v382, %v533
        %v583 = vmul.f32 %v383, %v533
        %v584 = vmul.f32 %v384, %v533
        %v585 = vmul.f32 %v385, %v533
        %v586 = vmul.f32 %v386, %v533
        %v587 = vmul.f32 %v387, %v533
        %v588 = vmul.f32 %v388, %v533
        %v589 = vmul.f32 %v389, %v533
        %v590 = vmul.f32 %v390, %v533
        %v591 = vmul.f32 %v391, %v533
        %v592 = vmul.f32 %v392, %v533
        %v593 = vmul.f32 %v393, %v533
        %v594 = vmul.f32 %v394, %v533
        %v595 = vmul.f32 %v395, %v533
        %v596 = vmul.f32 %v396, %v533
        %v597 = vmul.f32 %v397, %v533
        %v598 = vmax.f32 %v534, 0.0
        %v599 = vmax.f32 %v535, 0.0
        %v600 = vmax.f32 %v536, 0.0
        %v601 = vmax.f32 %v537, 0.0
        %v602 = vmax.f32 %v538, 0.0
        %v603 = vmax.f32 %v539, 0.0
        %v604 = vmax.f32 %v540, 0.0
        %v605 = vmax.f32 %v541, 0.0
        %v606 = vmax.f32 %v542, 0.0
        %v607 = vmax.f32 %v543, 0.0
        %v608 = vmax.f32 %v544, 0.0
        %v609 = vmax.f32 %v545, 0.0
        %v610 = vmax.f32 %v546, 0.0
        %v611 = vmax.f32 %v547, 0.0
        %v612 = vmax.f32 %v548, 0.0
        %v613 = vmax.f32 %v549, 0.0
        %v614 = vmax.f32 %v550, 0.0
        %v615 = vmax.f32 %v551, 0.0
        %v616 = vmax.f32 %v552, 0.0
        %v617 = vmax.f32 %v553, 0.0
        %v618 = vmax.f32 %v554, 0.0
        %v619 = vmax.f32 %v555, 0.0
        %v620 = vmax.f32 %v556, 0.0
        %v621 = vmax.f32 %v557, 0.0
        %v622 = vmax.f32 %v558, 0.0
        %v623 = vmax.f32 %v559, 0.0
        %v624 = vmax.f32 %v560, 0.0
        %v625 = vmax.f32 %v561, 0.0
        %v626 = vmax.f32 %v562, 0.0
        %v627 = vmax.f32 %v563, 0.0
        %v628 = vmax.f32 %v564, 0.0
        %v629 = vmax.f32 %v565, 0.0
        %v630 = vmax.f32 %v566, 0.0
        %v631 = vmax.f32 %v567, 0.0
        %v632 = vmax.f32 %v568, 0.0
        %v633 = vmax.f32 %v569, 0.0
        %v634 = vmax.f32 %v570, 0.0
        %v635 = vmax.f32 %v571, 0.0
        %v636 = vmax.f32 %v572, 0.0
        %v637 = vmax.f32 %v573, 0.0
        %v638 = vmax.f32 %v574, 0.0
        %v639 = vmax.f32 %v575, 0.0
        %v640 = vmax.f32 %v576, 0.0
        %v641 = vmax.f32 %v577, 0.0
        %v642 = vmax.f32 %v578, 0.0
        %v643 = vmax.f32 %v579, 0.0
        %v644 = vmax.f32 %v580, 0.0
        %v645 = vmax.f32 %v581, 0.0
        %v646 = vmax.f32 %v582, 0.0
        %v647 = vmax.f32 %v583, 0.0
        %v648 = vmax.f32 %v584, 0.0
        %v649 = vmax.f32 %v585, 0.0
        %v650 = vmax.f32 %v586, 0.0
        %v651 = vmax.f32 %v587, 0.0
        %v652 = vmax.f32 %v588, 0.0
        %v653 = vmax.f32 %v589, 0.0
        %v654 = vmax.f32 %v590, 0.0
        %v655 = vmax.f32 %v591, 0.0
        %v656 = vmax.f32 %v592, 0.0
        %v657 = vmax.f32 %v593, 0.0
        %v658 = vmax.f32 %v594, 0.0
        %v659 = vmax.f32 %v595, 0.0
        %v660 = vmax.f32 %v596, 0.0
        %v661 = vmax.f32 %v597, 0.0
        %662 = vst [vmem:[%s134] sm:$0xff] %v598
        %663 = vst [vmem:[%s134 + $0x8] sm:$0xff] %v599
        %664 = vst [vmem:[%s134 + $0x10] sm:$0xff] %v600
        %665 = vst [vmem:[%s134 + $0x18] sm:$0xff] %v601
        %666 = vst [vmem:[%s134 + $0x20] sm:$0xff] %v602
        %667 = vst [vmem:[%s134 + $0x28] sm:$0xff] %v603
        %668 = vst [vmem:[%s134 + $0x30] sm:$0xff] %v604
        %669 = vst [vmem:[%s134 + $0x38] sm:$0xff] %v605
        %670 = vst [vmem:[%s134 + $0x40] sm:$0xff] %v606
        %671 = vst [vmem:[%s134 + $0x48] sm:$0xff] %v607
        %672 = vst [vmem:[%s134 + $0x50] sm:$0xff] %v608
        %673 = vst [vmem:[%s134 + $0x58] sm:$0xff] %v609
        %674 = vst [vmem:[%s134 + $0x60] sm:$0xff] %v610
        %675 = vst [vmem:[%s134 + $0x68] sm:$0xff] %v611
        %676 = vst [vmem:[%s134 + $0x70] sm:$0xff] %v612
        %677 = vst [vmem:[%s134 + $0x78] sm:$0xff] %v613
        %678 = vst [vmem:[%s134 + $0x80] sm:$0xff] %v614
        %679 = vst [vmem:[%s134 + $0x88] sm:$0xff] %v615
        %680 = vst [vmem:[%s134 + $0x90] sm:$0xff] %v616
        %681 = vst [vmem:[%s134 + $0x98] sm:$0xff] %v617
        %682 = vst [vmem:[%s134 + $0xa0] sm:$0xff] %v618
        %683 = vst [vmem:[%s134 + $0xa8] sm:$0xff] %v619
        %684 = vst [vmem:[%s134 + $0xb0] sm:$0xff] %v620
        %685 = vst [vmem:[%s134 + $0xb8] sm:$0xff] %v621
        %686 = vst [vmem:[%s134 + $0xc0] sm:$0xff] %v622
        %687 = vst [vmem:[%s134 + $0xc8] sm:$0xff] %v623
        %688 = vst [vmem:[%s134 + $0xd0] sm:$0xff] %v624
        %689 = vst [vmem:[%s134 + $0xd8] sm:$0xff] %v625
        %690 = vst [vmem:[%s134 + $0xe0] sm:$0xff] %v626
        %691 = vst [vmem:[%s134 + $0xe8] sm:$0xff] %v627
        %692 = vst [vmem:[%s134 + $0xf0] sm:$0xff] %v628
        %693 = vst [vmem:[%s134 + $0xf8] sm:$0xff] %v629
        %694 = vst [vmem:[%s134 + $0x100] sm:$0xff] %v630
        %695 = vst [vmem:[%s134 + $0x108] sm:$0xff] %v631
        %696 = vst [vmem:[%s134 + $0x110] sm:$0xff] %v632
        %697 = vst [vmem:[%s134 + $0x118] sm:$0xff] %v633
        %698 = vst [vmem:[%s134 + $0x120] sm:$0xff] %v634
        %699 = vst [vmem:[%s134 + $0x128] sm:$0xff] %v635
        %700 = vst [vmem:[%s134 + $0x130] sm:$0xff] %v636
        %701 = vst [vmem:[%s134 + $0x138] sm:$0xff] %v637
        %702 = vst [vmem:[%s134 + $0x140] sm:$0xff] %v638
        %703 = vst [vmem:[%s134 + $0x148] sm:$0xff] %v639
        %704 = vst [vmem:[%s134 + $0x150] sm:$0xff] %v640
        %705 = vst [vmem:[%s134 + $0x158] sm:$0xff] %v641
        %706 = vst [vmem:[%s134 + $0x160] sm:$0xff] %v642
        %707 = vst [vmem:[%s134 + $0x168] sm:$0xff] %v643
        %708 = vst [vmem:[%s134 + $0x170] sm:$0xff] %v644
        %709 = vst [vmem:[%s134 + $0x178] sm:$0xff] %v645
        %710 = vst [vmem:[%s134 + $0x180] sm:$0xff] %v646
        %711 = vst [vmem:[%s134 + $0x188] sm:$0xff] %v647
        %712 = vst [vmem:[%s134 + $0x190] sm:$0xff] %v648
        %713 = vst [vmem:[%s134 + $0x198] sm:$0xff] %v649
        %714 = vst [vmem:[%s134 + $0x1a0] sm:$0xff] %v650
        %715 = vst [vmem:[%s134 + $0x1a8] sm:$0xff] %v651
        %716 = vst [vmem:[%s134 + $0x1b0] sm:$0xff] %v652
        %717 = vst [vmem:[%s134 + $0x1b8] sm:$0xff] %v653
        %718 = vst [vmem:[%s134 + $0x1c0] sm:$0xff] %v654
        %719 = vst [vmem:[%s134 + $0x1c8] sm:$0xff] %v655
        %720 = vst [vmem:[%s134 + $0x1d0] sm:$0xff] %v656
        %721 = vst [vmem:[%s134 + $0x1d8] sm:$0xff] %v657
        %722 = vst [vmem:[%s134 + $0x1e0] sm:$0xff] %v658
        %723 = vst [vmem:[%s134 + $0x1e8] sm:$0xff] %v659
        %724 = vst [vmem:[%s134 + $0x1f0] sm:$0xff] %v660
        %725 = vst [vmem:[%s134 + $0x1f8] sm:$0xff] %v661
        %s726 = sand.u32 %s52, 1
        %s727 = scalar_lea.sflag [#allocation4], %s726
        %s728 = sand.u32 %s52, 1
        %s729 = smul.addr %s728, 512
        %s730 = scalar_lea.vmem [#allocation5], %s729
        // Predicated region
        $region29: #{tpu_custom_call.1} parent=23 // pred_check
          %p731 = pneg %p62
        $region30: #{tpu_custom_call.1} parent=23 // pred_check_branch
          %733 = sbr.rel (%p731) target = $region32
        $region31: #{tpu_custom_call.1} parent=23 // pred_region
          %s735 = ssub.s32 8192, 8192
          %736 = vsyncadd %s727, %s735
          %s737 = smul.addr %s18, 64
          %s738 = smul.addr %s737, 128
          %s739 = scalar_lea.hbm %s1, %s738
          %s740 = sshll.u32 %s730, 4
          %s741 = int_to_ptr.vmem [resolvable:$true] %s740
          %746 = dma.vmem_to_hbm [thread:$0]  %s741, 8192, %s739, %s727, 128, 128, 8
        $region32: #{tpu_custom_call.1} parent=23 // pred_fallthru
          _
      $region24: #{tpu_custom_call.1} parent=5 // pred_fallthru
        _
      %p747 = scmp.le.s32.totalorder 2, %s13
      // Predicated region
      $region33: #{tpu_custom_call.1} parent=5 // pred_check
        %p748 = pneg %p747
      $region34: #{tpu_custom_call.1} parent=5 // pred_check_branch
        %750 = sbr.rel (%p748) target = $region36
      $region35: #{tpu_custom_call.1} parent=5 // pred_region
        %s751 = ssub.s32 %s13, 2
        // Predicated region
        $region37: #{tpu_custom_call.1} parent=35 // pred_check
          %p752 = pneg %p68
        $region38: #{tpu_custom_call.1} parent=35 // pred_check_branch
          %754 = sbr.rel (%p752) target = $region40
        $region39: #{tpu_custom_call.1} parent=35 // pred_region
          %s755 = sand.u32 %s53, 1
          %s756 = scalar_lea.sflag [#allocation4], %s755
          %s757 = sand.u32 %s53, 1
          %s758 = smul.addr %s757, 512
          %s759 = scalar_lea.vmem [#allocation5], %s758
          %760 = dma.done %s756, 8192
        $region40: #{tpu_custom_call.1} parent=35 // pred_fallthru
          _
      $region36: #{tpu_custom_call.1} parent=5 // pred_fallthru
        _
    $region6: #{tpu_custom_call.1} parent=1 // loop_footer
      %s17 = sadd.s32 1, %s13
    $region7: #{tpu_custom_call.1} parent=1 // loop_footer_branch
      %12 = sbr.rel target = $region3
    $region8: #{tpu_custom_call.1} parent=1 // loop_exit
      _
    %761 = vsyncpa [#allocation3], 1
    %s762 = scalar_lea.sflag [#allocation3], 1
    %763 = vsyncpa %s762, 1
    %764 = vsyncpa [#allocation4], 1
    %s765 = scalar_lea.sflag [#allocation4], 1
    %766 = vsyncpa %s765, 1

</llo_original>
